<compile_context>
chip_gen: v7x
topology: tpu7x:2x2x1
jax: 0.10.0
libtpu: 0.0.40
codegen_flags: <defaults>
</compile_context>

<pallas_src>
import jax
import jax.numpy as jnp
from jax.experimental import pallas as pl
from jax.experimental.pallas import tpu as pltpu


def _round_up(x, m):
    return (x + m - 1) // m * m


# ----------------------------- Pallas kernel ------------------------------ #
def _classifier_kernel(d_ref, p_ref, w1a_ref, w1b_ref, b1_ref, w2_ref, b2_ref,
                       o_ref):
    # d_ref : (tm, Kd) f32     p_ref : (tm, Kp) f32
    # w1a   : (Kd, H) bf16     w1b   : (Kp, H) bf16     b1: (1, H)   f32
    # w2    : (H, Npad) bf16   b2    : (1, Npad) f32    o : (tm, Npad) bf16
    h = jnp.dot(d_ref[...].astype(jnp.bfloat16), w1a_ref[...],
                preferred_element_type=jnp.float32)
    h = h + jnp.dot(p_ref[...].astype(jnp.bfloat16), w1b_ref[...],
                    preferred_element_type=jnp.float32)
    h = jnp.maximum(h + b1_ref[...], 0.0)                   # bias + ReLU, f32
    out = jnp.dot(h.astype(jnp.bfloat16), w2_ref[...],
                  preferred_element_type=jnp.float32)
    o_ref[...] = (out + b2_ref[...]).astype(o_ref.dtype)    # f32 bias, bf16 store


def classifier_pallas(depth_feat, patch_feat, w1a, w1b, b1, w2, b2, n_out):
    """depth_feat: (M, Kd) f32, patch_feat: (M, Kp) f32.
    w1a: (Kd, H) bf16, w1b: (Kp, H) bf16, b1: (1, H) f32,
    w2: (H, Npad) bf16, b2: (1, Npad) f32.  Returns (M, n_out) f32."""
    M, Kd = depth_feat.shape
    Kp = patch_feat.shape[1]
    H = w1a.shape[1]
    Npad = w2.shape[1]

    # Tile over M: one exact full-M block when tiny; otherwise aim for >= 2
    # grid steps (v7x megacore) with at most 512 rows per step.  Partial last
    # tiles are handled by Pallas boundary masking (no activation padding).
    if M <= 32:
        tm = M
    else:
        tm = min(512, _round_up(pl.cdiv(M, 2), 16))
    grid_m = pl.cdiv(M, tm)

    # VMEM budget: double-buffered activation/output tiles + resident weights.
    isz = depth_feat.dtype.itemsize
    est_vmem = 2 * (tm * Kd * isz + tm * Kp * isz
                    + Kd * H * 2 + Kp * H * 2 + H * Npad * 2
                    + tm * Npad * 2 + (H + Npad) * 4 * 8)
    vmem_limit = int(min(max(2 * est_vmem, 8 * 1024 * 1024), 64 * 1024 * 1024))

    flops = 2 * M * ((Kd + Kp) * H + H * Npad)
    bytes_accessed = ((depth_feat.size + patch_feat.size) * isz
                      + (w1a.size + w1b.size + w2.size) * 2
                      + (b1.size + b2.size) * 4 + M * Npad * 2)

    out = pl.pallas_call(
        _classifier_kernel,
        out_shape=jax.ShapeDtypeStruct((M, Npad), jnp.bfloat16),
        grid_spec=pltpu.PrefetchScalarGridSpec(
            num_scalar_prefetch=0,
            grid=(grid_m,),
            in_specs=[
                pl.BlockSpec((tm, Kd), lambda i: (i, 0)),    # depth activations
                pl.BlockSpec((tm, Kp), lambda i: (i, 0)),    # patch activations
                pl.BlockSpec((Kd, H), lambda i: (0, 0)),     # W1 depth half (resident)
                pl.BlockSpec((Kp, H), lambda i: (0, 0)),     # W1 patch half (resident)
                pl.BlockSpec((1, H), lambda i: (0, 0)),      # b1 (resident)
                pl.BlockSpec((H, Npad), lambda i: (0, 0)),   # W2 (resident)
                pl.BlockSpec((1, Npad), lambda i: (0, 0)),   # b2 (resident)
            ],
            out_specs=pl.BlockSpec((tm, Npad), lambda i: (i, 0)),
        ),
        compiler_params=pltpu.CompilerParams(
            dimension_semantics=("parallel",),
            vmem_limit_bytes=vmem_limit,
        ),
        cost_estimate=pl.CostEstimate(
            flops=flops, transcendentals=0, bytes_accessed=bytes_accessed),
    )(depth_feat, patch_feat, w1a, w1b, b1, w2, b2)

    return out[:, :n_out].astype(jnp.float32)


# ------------------------------ parameters -------------------------------- #
def init_classifier_params(key, depth_dim, patch_dim, hidden=512, n_out=2):
    in_channels = depth_dim + patch_dim
    k1, k2, k3, k4 = jax.random.split(key, 4)
    s1 = 1.0 / (in_channels ** 0.5)
    s2 = 1.0 / (hidden ** 0.5)
    w1 = jax.random.uniform(k1, (in_channels, hidden), jnp.float32, -s1, s1)
    b1 = jax.random.uniform(k2, (hidden,), jnp.float32, -s1, s1)
    w2 = jax.random.uniform(k3, (hidden, n_out), jnp.float32, -s2, s2)
    b2 = jax.random.uniform(k4, (n_out,), jnp.float32, -s2, s2)

    # Pre-split W1 into its depth/patch row halves (so the kernel never needs a
    # concatenated activation), pre-cast to bf16, and lane-pad the last layer
    # to 128 columns so kernel stores are unmasked.  All done ONCE.
    npad = _round_up(n_out, 128)
    return {
        "w1a": w1[:depth_dim].astype(jnp.bfloat16),
        "w1b": w1[depth_dim:].astype(jnp.bfloat16),
        "b1": b1.reshape(1, hidden),
        "w2": jnp.pad(w2, ((0, 0), (0, npad - n_out))).astype(jnp.bfloat16),
        "b2": jnp.pad(b2, (0, npad - n_out)).reshape(1, npad),
        "n_out": n_out,
        # f32 copies for the reference check only
        "_w1_f32": w1, "_b1_f32": b1, "_w2_f32": w2, "_b2_f32": b2,
    }


def classifier_forward(params, depth_map, patch_map, center_feat):
    """Matches Classifier.forward: center_feat is accepted but unused."""
    del center_feat  # unused in the reference PyTorch forward
    B = depth_map.shape[0]
    depth_feat = depth_map.reshape(B, -1)   # free view, no HBM copy
    patch_feat = patch_map.reshape(B, -1)
    return classifier_pallas(depth_feat, patch_feat,
                             params["w1a"], params["w1b"], params["b1"],
                             params["w2"], params["b2"], params["n_out"])


# --------------------------------- main ------------------------------------ #
if __name__ == "__main__":
    key = jax.random.PRNGKey(0)
    pkey, dkey, mkey, ckey = jax.random.split(key, 4)

    B = 2
    depth_map = jax.random.normal(dkey, (B, 4, 8, 8), jnp.float32)   # 256 feats
    patch_map = jax.random.normal(mkey, (B, 4, 8, 8), jnp.float32)   # 256 feats
    center_feat = jax.random.normal(ckey, (B, 32), jnp.float32)      # unused

    depth_dim = depth_map[0].size                                    # 256
    patch_dim = patch_map[0].size                                    # 256
    params = init_classifier_params(pkey, depth_dim, patch_dim)

    out = classifier_forward(params, depth_map, patch_map, center_feat)
    out = jax.block_until_ready(out)

    assert out.shape == (B, 2), out.shape
    assert jnp.all(jnp.isfinite(out))

    # Plain-JAX f32 reference (bf16 kernel path -> loose tolerance).
    x = jnp.concatenate(
        [depth_map.reshape(B, -1), patch_map.reshape(B, -1)], axis=1)
    h_ref = jnp.maximum(x @ params["_w1_f32"] + params["_b1_f32"], 0.0)
    ref = h_ref @ params["_w2_f32"] + params["_b2_f32"]
    assert jnp.max(jnp.abs(out - ref)) < 5e-2, jnp.max(jnp.abs(out - ref))

    print("KERNEL_OK")
</pallas_src>

<mosaic_0001>
module attributes {stable_mosaic.version = 11 : i64} {
  func.func @_classifier_kernel(%arg0: i32, %arg1: memref<2x256xf32, #tpu.memory_space<vmem>>, %arg2: memref<2x256xf32, #tpu.memory_space<vmem>>, %arg3: memref<256x512xbf16, #tpu.memory_space<vmem>>, %arg4: memref<256x512xbf16, #tpu.memory_space<vmem>>, %arg5: memref<1x512xf32, #tpu.memory_space<vmem>>, %arg6: memref<512x128xbf16, #tpu.memory_space<vmem>>, %arg7: memref<1x128xf32, #tpu.memory_space<vmem>>, %arg8: memref<2x128xbf16, #tpu.memory_space<vmem>>) attributes {dimension_semantics = [#tpu.dimension_semantics<parallel>], iteration_bounds = array<i64: 1>, scalar_prefetch = 0 : i64, scratch_operands = 0 : i64, tpu.core_type = #tpu.core_type<tc>, window_params = [{transform_indices = @transform_0, window_bounds = array<i64: 2, 256>}, {transform_indices = @transform_1, window_bounds = array<i64: 2, 256>}, {pipeline_mode = #tpu.pipeline_mode<synchronous>, transform_indices = @transform_2, window_bounds = array<i64: 256, 512>}, {pipeline_mode = #tpu.pipeline_mode<synchronous>, transform_indices = @transform_3, window_bounds = array<i64: 256, 512>}, {pipeline_mode = #tpu.pipeline_mode<synchronous>, transform_indices = @transform_4, window_bounds = array<i64: 1, 512>}, {pipeline_mode = #tpu.pipeline_mode<synchronous>, transform_indices = @transform_5, window_bounds = array<i64: 512, 128>}, {pipeline_mode = #tpu.pipeline_mode<synchronous>, transform_indices = @transform_6, window_bounds = array<i64: 1, 128>}, {transform_indices = @transform_7, window_bounds = array<i64: 2, 128>}]} {
    %c0 = arith.constant 0 : index
    %c0_0 = arith.constant 0 : index
    %0 = vector.load %arg1[%c0, %c0_0] : memref<2x256xf32, #tpu.memory_space<vmem>>, vector<2x256xf32>
    %1 = arith.truncf %0 : vector<2x256xf32> to vector<2x256xbf16>
    %c0_1 = arith.constant 0 : index
    %c0_2 = arith.constant 0 : index
    %2 = vector.load %arg3[%c0_1, %c0_2] : memref<256x512xbf16, #tpu.memory_space<vmem>>, vector<256x512xbf16>
    %cst = arith.constant dense<0.000000e+00> : vector<2x512xf32>
    %3 = tpu.matmul %1, %2, %cst {dimension_numbers = #tpu.dot_dimension_numbers<[1], [0], [0], [1], [0, 0, 1, 1], [], []>} : vector<2x256xbf16>, vector<256x512xbf16>, vector<2x512xf32> -> vector<2x512xf32>
    %c0_3 = arith.constant 0 : index
    %c0_4 = arith.constant 0 : index
    %4 = vector.load %arg2[%c0_3, %c0_4] : memref<2x256xf32, #tpu.memory_space<vmem>>, vector<2x256xf32>
    %5 = arith.truncf %4 : vector<2x256xf32> to vector<2x256xbf16>
    %c0_5 = arith.constant 0 : index
    %c0_6 = arith.constant 0 : index
    %6 = vector.load %arg4[%c0_5, %c0_6] : memref<256x512xbf16, #tpu.memory_space<vmem>>, vector<256x512xbf16>
    %cst_7 = arith.constant dense<0.000000e+00> : vector<2x512xf32>
    %7 = tpu.matmul %5, %6, %cst_7 {dimension_numbers = #tpu.dot_dimension_numbers<[1], [0], [0], [1], [0, 0, 1, 1], [], []>} : vector<2x256xbf16>, vector<256x512xbf16>, vector<2x512xf32> -> vector<2x512xf32>
    %8 = arith.addf %3, %7 : vector<2x512xf32>
    %c0_8 = arith.constant 0 : index
    %c0_9 = arith.constant 0 : index
    %9 = vector.load %arg5[%c0_8, %c0_9] : memref<1x512xf32, #tpu.memory_space<vmem>>, vector<1x512xf32>
    %10 = vector.broadcast %9 : vector<1x512xf32> to vector<2x512xf32>
    %11 = arith.addf %8, %10 : vector<2x512xf32>
    %cst_10 = arith.constant 0.000000e+00 : f32
    %12 = vector.broadcast %cst_10 : f32 to vector<2x512xf32>
    %13 = arith.maximumf %11, %12 : vector<2x512xf32>
    %14 = arith.truncf %13 : vector<2x512xf32> to vector<2x512xbf16>
    %c0_11 = arith.constant 0 : index
    %c0_12 = arith.constant 0 : index
    %15 = vector.load %arg6[%c0_11, %c0_12] : memref<512x128xbf16, #tpu.memory_space<vmem>>, vector<512x128xbf16>
    %cst_13 = arith.constant dense<0.000000e+00> : vector<2x128xf32>
    %16 = tpu.matmul %14, %15, %cst_13 {dimension_numbers = #tpu.dot_dimension_numbers<[1], [0], [0], [1], [0, 0, 1, 1], [], []>} : vector<2x512xbf16>, vector<512x128xbf16>, vector<2x128xf32> -> vector<2x128xf32>
    %c0_14 = arith.constant 0 : index
    %c0_15 = arith.constant 0 : index
    %17 = vector.load %arg7[%c0_14, %c0_15] : memref<1x128xf32, #tpu.memory_space<vmem>>, vector<1x128xf32>
    %18 = vector.broadcast %17 : vector<1x128xf32> to vector<2x128xf32>
    %19 = arith.addf %16, %18 : vector<2x128xf32>
    %20 = arith.truncf %19 : vector<2x128xf32> to vector<2x128xbf16>
    %c0_16 = arith.constant 0 : index
    %c0_17 = arith.constant 0 : index
    %21 = vector.load %arg8[%c0_16, %c0_17] : memref<2x128xbf16, #tpu.memory_space<vmem>>, vector<2x128xbf16>
    tpu.vector_store %arg8[%c0_16, %c0_17], %20 {strides = array<i32>} : memref<2x128xbf16, #tpu.memory_space<vmem>>, vector<2x128xbf16>,
    return
  }
  func.func @transform_0(%arg0: i32) -> (i32, i32) {
    %c0_i32 = arith.constant 0 : i32
    %c0_i32_0 = arith.constant 0 : i32
    return %arg0, %c0_i32 : i32, i32
  }
  func.func @transform_1(%arg0: i32) -> (i32, i32) {
    %c0_i32 = arith.constant 0 : i32
    %c0_i32_0 = arith.constant 0 : i32
    return %arg0, %c0_i32 : i32, i32
  }
  func.func @transform_2(%arg0: i32) -> (i32, i32) {
    %c0_i32 = arith.constant 0 : i32
    %c0_i32_0 = arith.constant 0 : i32
    %c0_i32_1 = arith.constant 0 : i32
    return %c0_i32, %c0_i32_0 : i32, i32
  }
  func.func @transform_3(%arg0: i32) -> (i32, i32) {
    %c0_i32 = arith.constant 0 : i32
    %c0_i32_0 = arith.constant 0 : i32
    %c0_i32_1 = arith.constant 0 : i32
    return %c0_i32, %c0_i32_0 : i32, i32
  }
  func.func @transform_4(%arg0: i32) -> (i32, i32) {
    %c0_i32 = arith.constant 0 : i32
    %c0_i32_0 = arith.constant 0 : i32
    %c0_i32_1 = arith.constant 0 : i32
    return %c0_i32, %c0_i32_0 : i32, i32
  }
  func.func @transform_5(%arg0: i32) -> (i32, i32) {
    %c0_i32 = arith.constant 0 : i32
    %c0_i32_0 = arith.constant 0 : i32
    %c0_i32_1 = arith.constant 0 : i32
    return %c0_i32, %c0_i32_0 : i32, i32
  }
  func.func @transform_6(%arg0: i32) -> (i32, i32) {
    %c0_i32 = arith.constant 0 : i32
    %c0_i32_0 = arith.constant 0 : i32
    %c0_i32_1 = arith.constant 0 : i32
    return %c0_i32, %c0_i32_0 : i32, i32
  }
  func.func @transform_7(%arg0: i32) -> (i32, i32) {
    %c0_i32 = arith.constant 0 : i32
    %c0_i32_0 = arith.constant 0 : i32
    return %arg0, %c0_i32 : i32, i32
  }
}

</mosaic_0001>

<llo_original>
// kernel: tpu_custom_call.1
$region0: #{tpu_custom_call.1}
  #allocation0 [shape = 'u32[]', space=smem, size = 0x4, offset = 0x4, fixed_abs, tag = 'smem constant byte address 0x4 - core index']
  #allocation1 [shape = 'u32[144,128]{1,0:T(1,128)}', space=vmem, size = 0x12000, scoped, tag = 'internal scratch']
  %s0 = inlined_call_operand.hbm [shape: f32[2,256], index: 0, kind: input, shape index: {}]
  %s1 = inlined_call_operand.hbm [shape: f32[2,256], index: 1, kind: input, shape index: {}]
  %s2 = inlined_call_operand.hbm [shape: bf16[256,512], index: 2, kind: input, shape index: {}]
  %s3 = inlined_call_operand.hbm [shape: bf16[256,512], index: 3, kind: input, shape index: {}]
  %s4 = inlined_call_operand.vmem [shape: f32[1,512], index: 4, kind: input, shape index: {}]
  %s5 = inlined_call_operand.hbm [shape: bf16[512,128], index: 5, kind: input, shape index: {}]
  %s6 = inlined_call_operand.vmem [shape: f32[1,128], index: 6, kind: input, shape index: {}]
  %s7 = inlined_call_operand.hbm [shape: bf16[2,128], index: 7, kind: output, shape index: {}]
  %s8 = sld [smem:[#allocation0]]
  $region58: #{tpu_custom_call.1} parent=0
    _
  %s10 = ssub.s32 1, %s8
  %s11 = scalar_select 0, %s10, %s8
  $region1: #{tpu_custom_call.1} parent=0
    #allocation2 [shape = 'u8[2048]{0}', space=vmem, size = 0x800, scoped, tag = 'input window, operand 0, single buffered']
    #allocation3 [shape = 's32[1]{0}', space=sflag, size = 0x4, scoped, tag = 'scoped memory for tpu_custom_call.1']
    #allocation4 [shape = 's32[1]{0}', space=sflag, size = 0x4, scoped, tag = 'scoped memory for tpu_custom_call.1']
    #allocation5 [shape = 'u8[2048]{0}', space=vmem, size = 0x800, scoped, tag = 'input window, operand 1, single buffered']
    #allocation6 [shape = 's32[1]{0}', space=sflag, size = 0x4, scoped, tag = 'scoped memory for tpu_custom_call.1']
    #allocation7 [shape = 'u8[262144]{0}', space=vmem, size = 0x40000, scoped, tag = 'input window, operand 2, single buffered']
    #allocation8 [shape = 'u8[262144]{0}', space=vmem, size = 0x40000, scoped, tag = 'input window, operand 3, single buffered']
    #allocation9 [shape = 's32[1]{0}', space=sflag, size = 0x4, scoped, tag = 'scoped memory for tpu_custom_call.1']
    #allocation10 [shape = 'u8[131072]{0}', space=vmem, size = 0x20000, scoped, tag = 'input window, operand 5, single buffered']
    #allocation11 [shape = 'u8[512]{0}', space=vmem, size = 0x400, scoped, tag = 'output window, operand 0, single buffered']
    %12 = vsyncpa [#allocation3], 0
    %13 = vsyncpa [#allocation6], 0
    %14 = vsyncpa [#allocation9], 0
    %15 = vsyncpa [#allocation4], 0
    // Predicated region
    $region2: #{tpu_custom_call.1} parent=1 // pred_check
      _
    $region3: #{tpu_custom_call.1} parent=1 // pred_check_branch
      %17 = sbr.rel (0) target = $region5
    $region4: #{tpu_custom_call.1} parent=1 // pred_region
      %s19 = ssub.s32 64, 64
      %20 = vsyncadd [#allocation3], %s19
      %s22 = sshll.u32 [#allocation2], 4
      %s23 = int_to_ptr.vmem [resolvable:$true] %s22
      %25 = dma.hbm_to_vmem [thread:$0]  %s0, 64, %s23, [#allocation3]
    $region5: #{tpu_custom_call.1} parent=1 // pred_fallthru
      _
    // Predicated region
    $region6: #{tpu_custom_call.1} parent=1 // pred_check
      _
    $region7: #{tpu_custom_call.1} parent=1 // pred_check_branch
      %27 = sbr.rel (0) target = $region9
    $region8: #{tpu_custom_call.1} parent=1 // pred_region
      %s29 = ssub.s32 64, 64
      %30 = vsyncadd [#allocation6], %s29
      %s32 = sshll.u32 [#allocation5], 4
      %s33 = int_to_ptr.vmem [resolvable:$true] %s32
      %35 = dma.hbm_to_vmem [thread:$0]  %s1, 64, %s33, [#allocation6]
    $region9: #{tpu_custom_call.1} parent=1 // pred_fallthru
      _
    // Predicated region
    $region10: #{tpu_custom_call.1} parent=1 // pred_check
      _
    $region11: #{tpu_custom_call.1} parent=1 // pred_check_branch
      %37 = sbr.rel (0) target = $region13
    $region12: #{tpu_custom_call.1} parent=1 // pred_region
      %s39 = ssub.s32 8192, 8192
      %40 = vsyncadd [#allocation6], %s39
      %s41 = sshll.u32 [#allocation7], 4
      %s42 = int_to_ptr.vmem [resolvable:$true] %s41
      %47 = dma.hbm_to_vmem [thread:$0]  %s2, 8192, %s42, [#allocation6], 256, 256, 16
    $region13: #{tpu_custom_call.1} parent=1 // pred_fallthru
      _
    // Predicated region
    $region14: #{tpu_custom_call.1} parent=1 // pred_check
      _
    $region15: #{tpu_custom_call.1} parent=1 // pred_check_branch
      %49 = sbr.rel (0) target = $region17
    $region16: #{tpu_custom_call.1} parent=1 // pred_region
      %s51 = ssub.s32 8192, 8192
      %52 = vsyncadd [#allocation9], %s51
      %s53 = sshll.u32 [#allocation8], 4
      %s54 = int_to_ptr.vmem [resolvable:$true] %s53
      %59 = dma.hbm_to_vmem [thread:$0]  %s3, 8192, %s54, [#allocation9], 256, 256, 16
    $region17: #{tpu_custom_call.1} parent=1 // pred_fallthru
      _
    // Predicated region
    $region18: #{tpu_custom_call.1} parent=1 // pred_check
      _
    $region19: #{tpu_custom_call.1} parent=1 // pred_check_branch
      %61 = sbr.rel (0) target = $region21
    $region20: #{tpu_custom_call.1} parent=1 // pred_region
      _
    $region21: #{tpu_custom_call.1} parent=1 // pred_fallthru
      _
    // Predicated region
    $region22: #{tpu_custom_call.1} parent=1 // pred_check
      _
    $region23: #{tpu_custom_call.1} parent=1 // pred_check_branch
      %63 = sbr.rel (0) target = $region25
    $region24: #{tpu_custom_call.1} parent=1 // pred_region
      %s65 = ssub.s32 4096, 4096
      %66 = vsyncadd [#allocation9], %s65
      %s67 = sshll.u32 [#allocation10], 4
      %s68 = int_to_ptr.vmem [resolvable:$true] %s67
      %73 = dma.hbm_to_vmem [thread:$0]  %s5, 4096, %s68, [#allocation9], 64, 64, 4
    $region25: #{tpu_custom_call.1} parent=1 // pred_fallthru
      _
    // Predicated region
    $region26: #{tpu_custom_call.1} parent=1 // pred_check
      _
    $region27: #{tpu_custom_call.1} parent=1 // pred_check_branch
      %75 = sbr.rel (0) target = $region29
    $region28: #{tpu_custom_call.1} parent=1 // pred_region
      _
    $region29: #{tpu_custom_call.1} parent=1 // pred_fallthru
      _
    // Predicated region
    $region30: #{tpu_custom_call.1} parent=1 // pred_check
      _
    $region31: #{tpu_custom_call.1} parent=1 // pred_check_branch
      %77 = sbr.rel (0) target = $region33
    $region32: #{tpu_custom_call.1} parent=1 // pred_region
      %78 = dma.done [#allocation3], 64
    $region33: #{tpu_custom_call.1} parent=1 // pred_fallthru
      _
    // Predicated region
    $region34: #{tpu_custom_call.1} parent=1 // pred_check
      _
    $region35: #{tpu_custom_call.1} parent=1 // pred_check_branch
      %80 = sbr.rel (0) target = $region37
    $region36: #{tpu_custom_call.1} parent=1 // pred_region
      %81 = dma.done [#allocation6], 64
    $region37: #{tpu_custom_call.1} parent=1 // pred_fallthru
      _
    // Predicated region
    $region38: #{tpu_custom_call.1} parent=1 // pred_check
      _
    $region39: #{tpu_custom_call.1} parent=1 // pred_check_branch
      %83 = sbr.rel (0) target = $region41
    $region40: #{tpu_custom_call.1} parent=1 // pred_region
      %84 = dma.done [#allocation6], 8192
    $region41: #{tpu_custom_call.1} parent=1 // pred_fallthru
      _
    // Predicated region
    $region42: #{tpu_custom_call.1} parent=1 // pred_check
      _
    $region43: #{tpu_custom_call.1} parent=1 // pred_check_branch
      %86 = sbr.rel (0) target = $region45
    $region44: #{tpu_custom_call.1} parent=1 // pred_region
      %87 = dma.done [#allocation9], 8192
    $region45: #{tpu_custom_call.1} parent=1 // pred_fallthru
      _
    // Predicated region
    $region46: #{tpu_custom_call.1} parent=1 // pred_check
      _
    $region47: #{tpu_custom_call.1} parent=1 // pred_check_branch
      %89 = sbr.rel (0) target = $region49
    $region48: #{tpu_custom_call.1} parent=1 // pred_region
      %90 = dma.done [#allocation9], 4096
    $region49: #{tpu_custom_call.1} parent=1 // pred_fallthru
      _
    %v92 = vld [vmem:[#allocation2] sm:$0xf]
    %v95 = vunpack.c.l.s4 1983009808
    %v96 = vunpack.c.0.s8 %v95
    %v97 = vlaneseq
    %v98 = vshrl.u32 %v97, 7
    %v99 = vsub.s32 %v96, %v98
    %v100 = vrot.slane %v92, %v99
    %v101 = vcombine.high %v100, %v100
    %v104 = vpack.c.bf16 %v100, %v100
    %v105 = vpack.c.bf16 %v101, %v101
    %v106 = vld [vmem:[#allocation7] sm:$0xff]
    %v107 = vld [vmem:[#allocation7 + $0x8] sm:$0xff]
    %v108 = vld [vmem:[#allocation7 + $0x10] sm:$0xff]
    %v109 = vld [vmem:[#allocation7 + $0x18] sm:$0xff]
    %v110 = vld [vmem:[#allocation7 + $0x20] sm:$0xff]
    %v111 = vld [vmem:[#allocation7 + $0x28] sm:$0xff]
    %v112 = vld [vmem:[#allocation7 + $0x30] sm:$0xff]
    %v113 = vld [vmem:[#allocation7 + $0x38] sm:$0xff]
    %v114 = vld [vmem:[#allocation7 + $0x40] sm:$0xff]
    %v115 = vld [vmem:[#allocation7 + $0x48] sm:$0xff]
    %v116 = vld [vmem:[#allocation7 + $0x50] sm:$0xff]
    %v117 = vld [vmem:[#allocation7 + $0x58] sm:$0xff]
    %v118 = vld [vmem:[#allocation7 + $0x60] sm:$0xff]
    %v119 = vld [vmem:[#allocation7 + $0x68] sm:$0xff]
    %v120 = vld [vmem:[#allocation7 + $0x70] sm:$0xff]
    %v121 = vld [vmem:[#allocation7 + $0x78] sm:$0xff]
    %v122 = vld [vmem:[#allocation7 + $0x80] sm:$0xff]
    %v123 = vld [vmem:[#allocation7 + $0x88] sm:$0xff]
    %v124 = vld [vmem:[#allocation7 + $0x90] sm:$0xff]
    %v125 = vld [vmem:[#allocation7 + $0x98] sm:$0xff]
    %v126 = vld [vmem:[#allocation7 + $0xa0] sm:$0xff]
    %v127 = vld [vmem:[#allocation7 + $0xa8] sm:$0xff]
    %v128 = vld [vmem:[#allocation7 + $0xb0] sm:$0xff]
    %v129 = vld [vmem:[#allocation7 + $0xb8] sm:$0xff]
    %v130 = vld [vmem:[#allocation7 + $0xc0] sm:$0xff]
    %v131 = vld [vmem:[#allocation7 + $0xc8] sm:$0xff]
    %v132 = vld [vmem:[#allocation7 + $0xd0] sm:$0xff]
    %v133 = vld [vmem:[#allocation7 + $0xd8] sm:$0xff]
    %v134 = vld [vmem:[#allocation7 + $0xe0] sm:$0xff]
    %v135 = vld [vmem:[#allocation7 + $0xe8] sm:$0xff]
    %v136 = vld [vmem:[#allocation7 + $0xf0] sm:$0xff]
    %v137 = vld [vmem:[#allocation7 + $0xf8] sm:$0xff]
    %v138 = vld [vmem:[#allocation7 + $0x100] sm:$0xff]
    %v139 = vld [vmem:[#allocation7 + $0x108] sm:$0xff]
    %v140 = vld [vmem:[#allocation7 + $0x110] sm:$0xff]
    %v141 = vld [vmem:[#allocation7 + $0x118] sm:$0xff]
    %v142 = vld [vmem:[#allocation7 + $0x120] sm:$0xff]
    %v143 = vld [vmem:[#allocation7 + $0x128] sm:$0xff]
    %v144 = vld [vmem:[#allocation7 + $0x130] sm:$0xff]
    %v145 = vld [vmem:[#allocation7 + $0x138] sm:$0xff]
    %v146 = vld [vmem:[#allocation7 + $0x140] sm:$0xff]
    %v147 = vld [vmem:[#allocation7 + $0x148] sm:$0xff]
    %v148 = vld [vmem:[#allocation7 + $0x150] sm:$0xff]
    %v149 = vld [vmem:[#allocation7 + $0x158] sm:$0xff]
    %v150 = vld [vmem:[#allocation7 + $0x160] sm:$0xff]
    %v151 = vld [vmem:[#allocation7 + $0x168] sm:$0xff]
    %v152 = vld [vmem:[#allocation7 + $0x170] sm:$0xff]
    %v153 = vld [vmem:[#allocation7 + $0x178] sm:$0xff]
    %v154 = vld [vmem:[#allocation7 + $0x180] sm:$0xff]
    %v155 = vld [vmem:[#allocation7 + $0x188] sm:$0xff]
    %v156 = vld [vmem:[#allocation7 + $0x190] sm:$0xff]
    %v157 = vld [vmem:[#allocation7 + $0x198] sm:$0xff]
    %v158 = vld [vmem:[#allocation7 + $0x1a0] sm:$0xff]
    %v159 = vld [vmem:[#allocation7 + $0x1a8] sm:$0xff]
    %v160 = vld [vmem:[#allocation7 + $0x1b0] sm:$0xff]
    %v161 = vld [vmem:[#allocation7 + $0x1b8] sm:$0xff]
    %v162 = vld [vmem:[#allocation7 + $0x1c0] sm:$0xff]
    %v163 = vld [vmem:[#allocation7 + $0x1c8] sm:$0xff]
    %v164 = vld [vmem:[#allocation7 + $0x1d0] sm:$0xff]
    %v165 = vld [vmem:[#allocation7 + $0x1d8] sm:$0xff]
    %v166 = vld [vmem:[#allocation7 + $0x1e0] sm:$0xff]
    %v167 = vld [vmem:[#allocation7 + $0x1e8] sm:$0xff]
    %v168 = vld [vmem:[#allocation7 + $0x1f0] sm:$0xff]
    %v169 = vld [vmem:[#allocation7 + $0x1f8] sm:$0xff]
    %v170 = vld [vmem:[#allocation5] sm:$0xf]
    %v173 = vunpack.c.l.s4 1983009808
    %v174 = vunpack.c.0.s8 %v173
    %v175 = vlaneseq
    %v176 = vshrl.u32 %v175, 7
    %v177 = vsub.s32 %v174, %v176
    %v178 = vrot.slane %v170, %v177
    %v179 = vcombine.high %v178, %v178
    %v182 = vpack.c.bf16 %v178, %v178
    %v183 = vpack.c.bf16 %v179, %v179
    %v184 = vld [vmem:[#allocation8] sm:$0xff]
    %v185 = vld [vmem:[#allocation8 + $0x8] sm:$0xff]
    %v186 = vld [vmem:[#allocation8 + $0x10] sm:$0xff]
    %v187 = vld [vmem:[#allocation8 + $0x18] sm:$0xff]
    %v188 = vld [vmem:[#allocation8 + $0x20] sm:$0xff]
    %v189 = vld [vmem:[#allocation8 + $0x28] sm:$0xff]
    %v190 = vld [vmem:[#allocation8 + $0x30] sm:$0xff]
    %v191 = vld [vmem:[#allocation8 + $0x38] sm:$0xff]
    %v192 = vld [vmem:[#allocation8 + $0x40] sm:$0xff]
    %v193 = vld [vmem:[#allocation8 + $0x48] sm:$0xff]
    %v194 = vld [vmem:[#allocation8 + $0x50] sm:$0xff]
    %v195 = vld [vmem:[#allocation8 + $0x58] sm:$0xff]
    %v196 = vld [vmem:[#allocation8 + $0x60] sm:$0xff]
    %v197 = vld [vmem:[#allocation8 + $0x68] sm:$0xff]
    %v198 = vld [vmem:[#allocation8 + $0x70] sm:$0xff]
    %v199 = vld [vmem:[#allocation8 + $0x78] sm:$0xff]
    %v200 = vld [vmem:[#allocation8 + $0x80] sm:$0xff]
    %v201 = vld [vmem:[#allocation8 + $0x88] sm:$0xff]
    %v202 = vld [vmem:[#allocation8 + $0x90] sm:$0xff]
    %v203 = vld [vmem:[#allocation8 + $0x98] sm:$0xff]
    %v204 = vld [vmem:[#allocation8 + $0xa0] sm:$0xff]
    %v205 = vld [vmem:[#allocation8 + $0xa8] sm:$0xff]
    %v206 = vld [vmem:[#allocation8 + $0xb0] sm:$0xff]
    %v207 = vld [vmem:[#allocation8 + $0xb8] sm:$0xff]
    %v208 = vld [vmem:[#allocation8 + $0xc0] sm:$0xff]
    %v209 = vld [vmem:[#allocation8 + $0xc8] sm:$0xff]
    %v210 = vld [vmem:[#allocation8 + $0xd0] sm:$0xff]
    %v211 = vld [vmem:[#allocation8 + $0xd8] sm:$0xff]
    %v212 = vld [vmem:[#allocation8 + $0xe0] sm:$0xff]
    %v213 = vld [vmem:[#allocation8 + $0xe8] sm:$0xff]
    %v214 = vld [vmem:[#allocation8 + $0xf0] sm:$0xff]
    %v215 = vld [vmem:[#allocation8 + $0xf8] sm:$0xff]
    %v216 = vld [vmem:[#allocation8 + $0x100] sm:$0xff]
    %v217 = vld [vmem:[#allocation8 + $0x108] sm:$0xff]
    %v218 = vld [vmem:[#allocation8 + $0x110] sm:$0xff]
    %v219 = vld [vmem:[#allocation8 + $0x118] sm:$0xff]
    %v220 = vld [vmem:[#allocation8 + $0x120] sm:$0xff]
    %v221 = vld [vmem:[#allocation8 + $0x128] sm:$0xff]
    %v222 = vld [vmem:[#allocation8 + $0x130] sm:$0xff]
    %v223 = vld [vmem:[#allocation8 + $0x138] sm:$0xff]
    %v224 = vld [vmem:[#allocation8 + $0x140] sm:$0xff]
    %v225 = vld [vmem:[#allocation8 + $0x148] sm:$0xff]
    %v226 = vld [vmem:[#allocation8 + $0x150] sm:$0xff]
    %v227 = vld [vmem:[#allocation8 + $0x158] sm:$0xff]
    %v228 = vld [vmem:[#allocation8 + $0x160] sm:$0xff]
    %v229 = vld [vmem:[#allocation8 + $0x168] sm:$0xff]
    %v230 = vld [vmem:[#allocation8 + $0x170] sm:$0xff]
    %v231 = vld [vmem:[#allocation8 + $0x178] sm:$0xff]
    %v232 = vld [vmem:[#allocation8 + $0x180] sm:$0xff]
    %v233 = vld [vmem:[#allocation8 + $0x188] sm:$0xff]
    %v234 = vld [vmem:[#allocation8 + $0x190] sm:$0xff]
    %v235 = vld [vmem:[#allocation8 + $0x198] sm:$0xff]
    %v236 = vld [vmem:[#allocation8 + $0x1a0] sm:$0xff]
    %v237 = vld [vmem:[#allocation8 + $0x1a8] sm:$0xff]
    %v238 = vld [vmem:[#allocation8 + $0x1b0] sm:$0xff]
    %v239 = vld [vmem:[#allocation8 + $0x1b8] sm:$0xff]
    %v240 = vld [vmem:[#allocation8 + $0x1c0] sm:$0xff]
    %v241 = vld [vmem:[#allocation8 + $0x1c8] sm:$0xff]
    %v242 = vld [vmem:[#allocation8 + $0x1d0] sm:$0xff]
    %v243 = vld [vmem:[#allocation8 + $0x1d8] sm:$0xff]
    %v244 = vld [vmem:[#allocation8 + $0x1e0] sm:$0xff]
    %v245 = vld [vmem:[#allocation8 + $0x1e8] sm:$0xff]
    %v246 = vld [vmem:[#allocation8 + $0x1f0] sm:$0xff]
    %v247 = vld [vmem:[#allocation8 + $0x1f8] sm:$0xff]
    %v312 = vunpack.c.l.b16 %v184
    %v313 = vunpack.c.h.b16 %v184
    %v314 = vunpack.c.l.b16 %v185
    %v315 = vunpack.c.h.b16 %v185
    %v316 = vunpack.c.l.b16 %v186
    %v317 = vunpack.c.h.b16 %v186
    %v318 = vunpack.c.l.b16 %v187
    %v319 = vunpack.c.h.b16 %v187
    %v320 = vunpack.c.l.b16 %v188
    %v321 = vunpack.c.h.b16 %v188
    %v322 = vunpack.c.l.b16 %v189
    %v323 = vunpack.c.h.b16 %v189
    %v324 = vunpack.c.l.b16 %v190
    %v325 = vunpack.c.h.b16 %v190
    %v326 = vunpack.c.l.b16 %v191
    %v327 = vunpack.c.h.b16 %v191
    %v328 = vunpack.c.l.b16 %v192
    %v329 = vunpack.c.h.b16 %v192
    %v330 = vunpack.c.l.b16 %v193
    %v331 = vunpack.c.h.b16 %v193
    %v332 = vunpack.c.l.b16 %v194
    %v333 = vunpack.c.h.b16 %v194
    %v334 = vunpack.c.l.b16 %v195
    %v335 = vunpack.c.h.b16 %v195
    %v336 = vunpack.c.l.b16 %v196
    %v337 = vunpack.c.h.b16 %v196
    %v338 = vunpack.c.l.b16 %v197
    %v339 = vunpack.c.h.b16 %v197
    %v340 = vunpack.c.l.b16 %v198
    %v341 = vunpack.c.h.b16 %v198
    %v342 = vunpack.c.l.b16 %v199
    %v343 = vunpack.c.h.b16 %v199
    %v344 = vunpack.c.l.b16 %v200
    %v345 = vunpack.c.h.b16 %v200
    %v346 = vunpack.c.l.b16 %v201
    %v347 = vunpack.c.h.b16 %v201
    %v348 = vunpack.c.l.b16 %v202
    %v349 = vunpack.c.h.b16 %v202
    %v350 = vunpack.c.l.b16 %v203
    %v351 = vunpack.c.h.b16 %v203
    %v352 = vunpack.c.l.b16 %v204
    %v353 = vunpack.c.h.b16 %v204
    %v354 = vunpack.c.l.b16 %v205
    %v355 = vunpack.c.h.b16 %v205
    %v356 = vunpack.c.l.b16 %v206
    %v357 = vunpack.c.h.b16 %v206
    %v358 = vunpack.c.l.b16 %v207
    %v359 = vunpack.c.h.b16 %v207
    %v360 = vunpack.c.l.b16 %v208
    %v361 = vunpack.c.h.b16 %v208
    %v362 = vunpack.c.l.b16 %v209
    %v363 = vunpack.c.h.b16 %v209
    %v364 = vunpack.c.l.b16 %v210
    %v365 = vunpack.c.h.b16 %v210
    %v366 = vunpack.c.l.b16 %v211
    %v367 = vunpack.c.h.b16 %v211
    %v368 = vunpack.c.l.b16 %v212
    %v369 = vunpack.c.h.b16 %v212
    %v370 = vunpack.c.l.b16 %v213
    %v371 = vunpack.c.h.b16 %v213
    %v372 = vunpack.c.l.b16 %v214
    %v373 = vunpack.c.h.b16 %v214
    %v374 = vunpack.c.l.b16 %v215
    %v375 = vunpack.c.h.b16 %v215
    %v376 = vunpack.c.l.b16 %v216
    %v377 = vunpack.c.h.b16 %v216
    %v378 = vunpack.c.l.b16 %v217
    %v379 = vunpack.c.h.b16 %v217
    %v380 = vunpack.c.l.b16 %v218
    %v381 = vunpack.c.h.b16 %v218
    %v382 = vunpack.c.l.b16 %v219
    %v383 = vunpack.c.h.b16 %v219
    %v384 = vunpack.c.l.b16 %v220
    %v385 = vunpack.c.h.b16 %v220
    %v386 = vunpack.c.l.b16 %v221
    %v387 = vunpack.c.h.b16 %v221
    %v388 = vunpack.c.l.b16 %v222
    %v389 = vunpack.c.h.b16 %v222
    %v390 = vunpack.c.l.b16 %v223
    %v391 = vunpack.c.h.b16 %v223
    %v392 = vunpack.c.l.b16 %v224
    %v393 = vunpack.c.h.b16 %v224
    %v394 = vunpack.c.l.b16 %v225
    %v395 = vunpack.c.h.b16 %v225
    %v396 = vunpack.c.l.b16 %v226
    %v397 = vunpack.c.h.b16 %v226
    %v398 = vunpack.c.l.b16 %v227
    %v399 = vunpack.c.h.b16 %v227
    %v400 = vunpack.c.l.b16 %v228
    %v401 = vunpack.c.h.b16 %v228
    %v402 = vunpack.c.l.b16 %v229
    %v403 = vunpack.c.h.b16 %v229
    %v404 = vunpack.c.l.b16 %v230
    %v405 = vunpack.c.h.b16 %v230
    %v406 = vunpack.c.l.b16 %v231
    %v407 = vunpack.c.h.b16 %v231
    %v408 = vunpack.c.l.b16 %v232
    %v409 = vunpack.c.h.b16 %v232
    %v410 = vunpack.c.l.b16 %v233
    %v411 = vunpack.c.h.b16 %v233
    %v412 = vunpack.c.l.b16 %v234
    %v413 = vunpack.c.h.b16 %v234
    %v414 = vunpack.c.l.b16 %v235
    %v415 = vunpack.c.h.b16 %v235
    %v416 = vunpack.c.l.b16 %v236
    %v417 = vunpack.c.h.b16 %v236
    %v418 = vunpack.c.l.b16 %v237
    %v419 = vunpack.c.h.b16 %v237
    %v420 = vunpack.c.l.b16 %v238
    %v421 = vunpack.c.h.b16 %v238
    %v422 = vunpack.c.l.b16 %v239
    %v423 = vunpack.c.h.b16 %v239
    %v424 = vunpack.c.l.b16 %v240
    %v425 = vunpack.c.h.b16 %v240
    %v426 = vunpack.c.l.b16 %v241
    %v427 = vunpack.c.h.b16 %v241
    %v428 = vunpack.c.l.b16 %v242
    %v429 = vunpack.c.h.b16 %v242
    %v430 = vunpack.c.l.b16 %v243
    %v431 = vunpack.c.h.b16 %v243
    %v432 = vunpack.c.l.b16 %v244
    %v433 = vunpack.c.h.b16 %v244
    %v434 = vunpack.c.l.b16 %v245
    %v435 = vunpack.c.h.b16 %v245
    %v436 = vunpack.c.l.b16 %v246
    %v437 = vunpack.c.h.b16 %v246
    %v438 = vunpack.c.l.b16 %v247
    %v439 = vunpack.c.h.b16 %v247
    %v440 = vpack.c.b16 %v316, %v312
    %v441 = vpack.c.b16 %v317, %v313
    %v442 = vpack.c.b16 %v318, %v314
    %v443 = vpack.c.b16 %v319, %v315
    %v444 = vpack.c.b16 %v324, %v320
    %v445 = vpack.c.b16 %v325, %v321
    %v446 = vpack.c.b16 %v326, %v322
    %v447 = vpack.c.b16 %v327, %v323
    %v448 = vpack.c.b16 %v332, %v328
    %v449 = vpack.c.b16 %v333, %v329
    %v450 = vpack.c.b16 %v334, %v330
    %v451 = vpack.c.b16 %v335, %v331
    %v452 = vpack.c.b16 %v340, %v336
    %v453 = vpack.c.b16 %v341, %v337
    %v454 = vpack.c.b16 %v342, %v338
    %v455 = vpack.c.b16 %v343, %v339
    %v456 = vpack.c.b16 %v348, %v344
    %v457 = vpack.c.b16 %v349, %v345
    %v458 = vpack.c.b16 %v350, %v346
    %v459 = vpack.c.b16 %v351, %v347
    %v460 = vpack.c.b16 %v356, %v352
    %v461 = vpack.c.b16 %v357, %v353
    %v462 = vpack.c.b16 %v358, %v354
    %v463 = vpack.c.b16 %v359, %v355
    %v464 = vpack.c.b16 %v364, %v360
    %v465 = vpack.c.b16 %v365, %v361
    %v466 = vpack.c.b16 %v366, %v362
    %v467 = vpack.c.b16 %v367, %v363
    %v468 = vpack.c.b16 %v372, %v368
    %v469 = vpack.c.b16 %v373, %v369
    %v470 = vpack.c.b16 %v374, %v370
    %v471 = vpack.c.b16 %v375, %v371
    %v472 = vpack.c.b16 %v380, %v376
    %v473 = vpack.c.b16 %v381, %v377
    %v474 = vpack.c.b16 %v382, %v378
    %v475 = vpack.c.b16 %v383, %v379
    %v476 = vpack.c.b16 %v388, %v384
    %v477 = vpack.c.b16 %v389, %v385
    %v478 = vpack.c.b16 %v390, %v386
    %v479 = vpack.c.b16 %v391, %v387
    %v480 = vpack.c.b16 %v396, %v392
    %v481 = vpack.c.b16 %v397, %v393
    %v482 = vpack.c.b16 %v398, %v394
    %v483 = vpack.c.b16 %v399, %v395
    %v484 = vpack.c.b16 %v404, %v400
    %v485 = vpack.c.b16 %v405, %v401
    %v486 = vpack.c.b16 %v406, %v402
    %v487 = vpack.c.b16 %v407, %v403
    %v488 = vpack.c.b16 %v412, %v408
    %v489 = vpack.c.b16 %v413, %v409
    %v490 = vpack.c.b16 %v414, %v410
    %v491 = vpack.c.b16 %v415, %v411
    %v492 = vpack.c.b16 %v420, %v416
    %v493 = vpack.c.b16 %v421, %v417
    %v494 = vpack.c.b16 %v422, %v418
    %v495 = vpack.c.b16 %v423, %v419
    %v496 = vpack.c.b16 %v428, %v424
    %v497 = vpack.c.b16 %v429, %v425
    %v498 = vpack.c.b16 %v430, %v426
    %v499 = vpack.c.b16 %v431, %v427
    %v500 = vpack.c.b16 %v436, %v432
    %v501 = vpack.c.b16 %v437, %v433
    %v502 = vpack.c.b16 %v438, %v434
    %v503 = vpack.c.b16 %v439, %v435
    %568 = vmatprep.subr.bf16.mxu0 %v441
    %569 = vmatpush1.bf16.msra.mxu0 %v440
    %570 = vmatprep.subr.bf16.mxu0 %v445
    %571 = vmatpush1.bf16.msra.mxu0 %v444
    %572 = vmatprep.subr.bf16.mxu0 %v449
    %573 = vmatpush1.bf16.msra.mxu0 %v448
    %574 = vmatprep.subr.bf16.mxu0 %v453
    %575 = vmatpush1.bf16.msra.mxu0 %v452
    %576 = vmatprep.subr.bf16.mxu0 %v457
    %577 = vmatpush1.bf16.msra.mxu0 %v456
    %578 = vmatprep.subr.bf16.mxu0 %v461
    %579 = vmatpush1.bf16.msra.mxu0 %v460
    %580 = vmatprep.subr.bf16.mxu0 %v465
    %581 = vmatpush1.bf16.msra.mxu0 %v464
    %582 = vmatprep.subr.bf16.mxu0 %v469
    %583 = vmatpush1.bf16.msra.mxu0 %v468
    %584 = vmatprep.subr.bf16.mxu0 %v473
    %585 = vmatpush1.bf16.msra.mxu0 %v472
    %586 = vmatprep.subr.bf16.mxu0 %v477
    %587 = vmatpush1.bf16.msra.mxu0 %v476
    %588 = vmatprep.subr.bf16.mxu0 %v481
    %589 = vmatpush1.bf16.msra.mxu0 %v480
    %590 = vmatprep.subr.bf16.mxu0 %v485
    %591 = vmatpush1.bf16.msra.mxu0 %v484
    %592 = vmatprep.subr.bf16.mxu0 %v489
    %593 = vmatpush1.bf16.msra.mxu0 %v488
    %594 = vmatprep.subr.bf16.mxu0 %v493
    %595 = vmatpush1.bf16.msra.mxu0 %v492
    %596 = vmatprep.subr.bf16.mxu0 %v497
    %597 = vmatpush1.bf16.msra.mxu0 %v496
    %598 = vmatprep.subr.bf16.mxu0 %v501
    %599 = vmatpush1.bf16.msra.mxu0 %v500
    %600 = vmatprep.mubr.bf16.mxu0 %v183
    %601 = vmatmul.mubr.bf16.gmra.mrb[0].mxu0 %v182
    %v602 = vpop.f32.mrb[0].mxu0
    %v603 = vadd.f32 0.0, %v602
    %v604 = vpop.f32.mrb[0].mxu0
    %v605 = vadd.f32 0.0, %v604
    %v606 = vpop.f32.mrb[0].mxu0
    %v607 = vpop.f32.mrb[0].mxu0
    %608 = vdwg.mxu0
    %609 = vmatprep.subr.bf16.mxu0 %v443
    %610 = vmatpush1.bf16.msra.mxu0 %v442
    %611 = vmatprep.subr.bf16.mxu0 %v447
    %612 = vmatpush1.bf16.msra.mxu0 %v446
    %613 = vmatprep.subr.bf16.mxu0 %v451
    %614 = vmatpush1.bf16.msra.mxu0 %v450
    %615 = vmatprep.subr.bf16.mxu0 %v455
    %616 = vmatpush1.bf16.msra.mxu0 %v454
    %617 = vmatprep.subr.bf16.mxu0 %v459
    %618 = vmatpush1.bf16.msra.mxu0 %v458
    %619 = vmatprep.subr.bf16.mxu0 %v463
    %620 = vmatpush1.bf16.msra.mxu0 %v462
    %621 = vmatprep.subr.bf16.mxu0 %v467
    %622 = vmatpush1.bf16.msra.mxu0 %v466
    %623 = vmatprep.subr.bf16.mxu0 %v471
    %624 = vmatpush1.bf16.msra.mxu0 %v470
    %625 = vmatprep.subr.bf16.mxu0 %v475
    %626 = vmatpush1.bf16.msra.mxu0 %v474
    %627 = vmatprep.subr.bf16.mxu0 %v479
    %628 = vmatpush1.bf16.msra.mxu0 %v478
    %629 = vmatprep.subr.bf16.mxu0 %v483
    %630 = vmatpush1.bf16.msra.mxu0 %v482
    %631 = vmatprep.subr.bf16.mxu0 %v487
    %632 = vmatpush1.bf16.msra.mxu0 %v486
    %633 = vmatprep.subr.bf16.mxu0 %v491
    %634 = vmatpush1.bf16.msra.mxu0 %v490
    %635 = vmatprep.subr.bf16.mxu0 %v495
    %636 = vmatpush1.bf16.msra.mxu0 %v494
    %637 = vmatprep.subr.bf16.mxu0 %v499
    %638 = vmatpush1.bf16.msra.mxu0 %v498
    %639 = vmatprep.subr.bf16.mxu0 %v503
    %640 = vmatpush1.bf16.msra.mxu0 %v502
    %641 = vmatprep.mubr.bf16.mxu0 %v183
    %642 = vmatmul.mubr.bf16.gmra.mrb[0].mxu0 %v182
    %v643 = vpop.f32.mrb[0].mxu0
    %v644 = vadd.f32 0.0, %v643
    %v645 = vpop.f32.mrb[0].mxu0
    %v646 = vadd.f32 0.0, %v645
    %v647 = vpop.f32.mrb[0].mxu0
    %v648 = vpop.f32.mrb[0].mxu0
    %649 = vdwg.mxu0
    %v714 = vunpack.c.l.b16 %v106
    %v715 = vunpack.c.h.b16 %v106
    %v716 = vunpack.c.l.b16 %v107
    %v717 = vunpack.c.h.b16 %v107
    %v718 = vunpack.c.l.b16 %v108
    %v719 = vunpack.c.h.b16 %v108
    %v720 = vunpack.c.l.b16 %v109
    %v721 = vunpack.c.h.b16 %v109
    %v722 = vunpack.c.l.b16 %v110
    %v723 = vunpack.c.h.b16 %v110
    %v724 = vunpack.c.l.b16 %v111
    %v725 = vunpack.c.h.b16 %v111
    %v726 = vunpack.c.l.b16 %v112
    %v727 = vunpack.c.h.b16 %v112
    %v728 = vunpack.c.l.b16 %v113
    %v729 = vunpack.c.h.b16 %v113
    %v730 = vunpack.c.l.b16 %v114
    %v731 = vunpack.c.h.b16 %v114
    %v732 = vunpack.c.l.b16 %v115
    %v733 = vunpack.c.h.b16 %v115
    %v734 = vunpack.c.l.b16 %v116
    %v735 = vunpack.c.h.b16 %v116
    %v736 = vunpack.c.l.b16 %v117
    %v737 = vunpack.c.h.b16 %v117
    %v738 = vunpack.c.l.b16 %v118
    %v739 = vunpack.c.h.b16 %v118
    %v740 = vunpack.c.l.b16 %v119
    %v741 = vunpack.c.h.b16 %v119
    %v742 = vunpack.c.l.b16 %v120
    %v743 = vunpack.c.h.b16 %v120
    %v744 = vunpack.c.l.b16 %v121
    %v745 = vunpack.c.h.b16 %v121
    %v746 = vunpack.c.l.b16 %v122
    %v747 = vunpack.c.h.b16 %v122
    %v748 = vunpack.c.l.b16 %v123
    %v749 = vunpack.c.h.b16 %v123
    %v750 = vunpack.c.l.b16 %v124
    %v751 = vunpack.c.h.b16 %v124
    %v752 = vunpack.c.l.b16 %v125
    %v753 = vunpack.c.h.b16 %v125
    %v754 = vunpack.c.l.b16 %v126
    %v755 = vunpack.c.h.b16 %v126
    %v756 = vunpack.c.l.b16 %v127
    %v757 = vunpack.c.h.b16 %v127
    %v758 = vunpack.c.l.b16 %v128
    %v759 = vunpack.c.h.b16 %v128
    %v760 = vunpack.c.l.b16 %v129
    %v761 = vunpack.c.h.b16 %v129
    %v762 = vunpack.c.l.b16 %v130
    %v763 = vunpack.c.h.b16 %v130
    %v764 = vunpack.c.l.b16 %v131
    %v765 = vunpack.c.h.b16 %v131
    %v766 = vunpack.c.l.b16 %v132
    %v767 = vunpack.c.h.b16 %v132
    %v768 = vunpack.c.l.b16 %v133
    %v769 = vunpack.c.h.b16 %v133
    %v770 = vunpack.c.l.b16 %v134
    %v771 = vunpack.c.h.b16 %v134
    %v772 = vunpack.c.l.b16 %v135
    %v773 = vunpack.c.h.b16 %v135
    %v774 = vunpack.c.l.b16 %v136
    %v775 = vunpack.c.h.b16 %v136
    %v776 = vunpack.c.l.b16 %v137
    %v777 = vunpack.c.h.b16 %v137
    %v778 = vunpack.c.l.b16 %v138
    %v779 = vunpack.c.h.b16 %v138
    %v780 = vunpack.c.l.b16 %v139
    %v781 = vunpack.c.h.b16 %v139
    %v782 = vunpack.c.l.b16 %v140
    %v783 = vunpack.c.h.b16 %v140
    %v784 = vunpack.c.l.b16 %v141
    %v785 = vunpack.c.h.b16 %v141
    %v786 = vunpack.c.l.b16 %v142
    %v787 = vunpack.c.h.b16 %v142
    %v788 = vunpack.c.l.b16 %v143
    %v789 = vunpack.c.h.b16 %v143
    %v790 = vunpack.c.l.b16 %v144
    %v791 = vunpack.c.h.b16 %v144
    %v792 = vunpack.c.l.b16 %v145
    %v793 = vunpack.c.h.b16 %v145
    %v794 = vunpack.c.l.b16 %v146
    %v795 = vunpack.c.h.b16 %v146
    %v796 = vunpack.c.l.b16 %v147
    %v797 = vunpack.c.h.b16 %v147
    %v798 = vunpack.c.l.b16 %v148
    %v799 = vunpack.c.h.b16 %v148
    %v800 = vunpack.c.l.b16 %v149
    %v801 = vunpack.c.h.b16 %v149
    %v802 = vunpack.c.l.b16 %v150
    %v803 = vunpack.c.h.b16 %v150
    %v804 = vunpack.c.l.b16 %v151
    %v805 = vunpack.c.h.b16 %v151
    %v806 = vunpack.c.l.b16 %v152
    %v807 = vunpack.c.h.b16 %v152
    %v808 = vunpack.c.l.b16 %v153
    %v809 = vunpack.c.h.b16 %v153
    %v810 = vunpack.c.l.b16 %v154
    %v811 = vunpack.c.h.b16 %v154
    %v812 = vunpack.c.l.b16 %v155
    %v813 = vunpack.c.h.b16 %v155
    %v814 = vunpack.c.l.b16 %v156
    %v815 = vunpack.c.h.b16 %v156
    %v816 = vunpack.c.l.b16 %v157
    %v817 = vunpack.c.h.b16 %v157
    %v818 = vunpack.c.l.b16 %v158
    %v819 = vunpack.c.h.b16 %v158
    %v820 = vunpack.c.l.b16 %v159
    %v821 = vunpack.c.h.b16 %v159
    %v822 = vunpack.c.l.b16 %v160
    %v823 = vunpack.c.h.b16 %v160
    %v824 = vunpack.c.l.b16 %v161
    %v825 = vunpack.c.h.b16 %v161
    %v826 = vunpack.c.l.b16 %v162
    %v827 = vunpack.c.h.b16 %v162
    %v828 = vunpack.c.l.b16 %v163
    %v829 = vunpack.c.h.b16 %v163
    %v830 = vunpack.c.l.b16 %v164
    %v831 = vunpack.c.h.b16 %v164
    %v832 = vunpack.c.l.b16 %v165
    %v833 = vunpack.c.h.b16 %v165
    %v834 = vunpack.c.l.b16 %v166
    %v835 = vunpack.c.h.b16 %v166
    %v836 = vunpack.c.l.b16 %v167
    %v837 = vunpack.c.h.b16 %v167
    %v838 = vunpack.c.l.b16 %v168
    %v839 = vunpack.c.h.b16 %v168
    %v840 = vunpack.c.l.b16 %v169
    %v841 = vunpack.c.h.b16 %v169
    %v842 = vpack.c.b16 %v718, %v714
    %v843 = vpack.c.b16 %v719, %v715
    %v844 = vpack.c.b16 %v720, %v716
    %v845 = vpack.c.b16 %v721, %v717
    %v846 = vpack.c.b16 %v726, %v722
    %v847 = vpack.c.b16 %v727, %v723
    %v848 = vpack.c.b16 %v728, %v724
    %v849 = vpack.c.b16 %v729, %v725
    %v850 = vpack.c.b16 %v734, %v730
    %v851 = vpack.c.b16 %v735, %v731
    %v852 = vpack.c.b16 %v736, %v732
    %v853 = vpack.c.b16 %v737, %v733
    %v854 = vpack.c.b16 %v742, %v738
    %v855 = vpack.c.b16 %v743, %v739
    %v856 = vpack.c.b16 %v744, %v740
    %v857 = vpack.c.b16 %v745, %v741
    %v858 = vpack.c.b16 %v750, %v746
    %v859 = vpack.c.b16 %v751, %v747
    %v860 = vpack.c.b16 %v752, %v748
    %v861 = vpack.c.b16 %v753, %v749
    %v862 = vpack.c.b16 %v758, %v754
    %v863 = vpack.c.b16 %v759, %v755
    %v864 = vpack.c.b16 %v760, %v756
    %v865 = vpack.c.b16 %v761, %v757
    %v866 = vpack.c.b16 %v766, %v762
    %v867 = vpack.c.b16 %v767, %v763
    %v868 = vpack.c.b16 %v768, %v764
    %v869 = vpack.c.b16 %v769, %v765
    %v870 = vpack.c.b16 %v774, %v770
    %v871 = vpack.c.b16 %v775, %v771
    %v872 = vpack.c.b16 %v776, %v772
    %v873 = vpack.c.b16 %v777, %v773
    %v874 = vpack.c.b16 %v782, %v778
    %v875 = vpack.c.b16 %v783, %v779
    %v876 = vpack.c.b16 %v784, %v780
    %v877 = vpack.c.b16 %v785, %v781
    %v878 = vpack.c.b16 %v790, %v786
    %v879 = vpack.c.b16 %v791, %v787
    %v880 = vpack.c.b16 %v792, %v788
    %v881 = vpack.c.b16 %v793, %v789
    %v882 = vpack.c.b16 %v798, %v794
    %v883 = vpack.c.b16 %v799, %v795
    %v884 = vpack.c.b16 %v800, %v796
    %v885 = vpack.c.b16 %v801, %v797
    %v886 = vpack.c.b16 %v806, %v802
    %v887 = vpack.c.b16 %v807, %v803
    %v888 = vpack.c.b16 %v808, %v804
    %v889 = vpack.c.b16 %v809, %v805
    %v890 = vpack.c.b16 %v814, %v810
    %v891 = vpack.c.b16 %v815, %v811
    %v892 = vpack.c.b16 %v816, %v812
    %v893 = vpack.c.b16 %v817, %v813
    %v894 = vpack.c.b16 %v822, %v818
    %v895 = vpack.c.b16 %v823, %v819
    %v896 = vpack.c.b16 %v824, %v820
    %v897 = vpack.c.b16 %v825, %v821
    %v898 = vpack.c.b16 %v830, %v826
    %v899 = vpack.c.b16 %v831, %v827
    %v900 = vpack.c.b16 %v832, %v828
    %v901 = vpack.c.b16 %v833, %v829
    %v902 = vpack.c.b16 %v838, %v834
    %v903 = vpack.c.b16 %v839, %v835
    %v904 = vpack.c.b16 %v840, %v836
    %v905 = vpack.c.b16 %v841, %v837
    %970 = vmatprep.subr.bf16.mxu0 %v843
    %971 = vmatpush1.bf16.msra.mxu0 %v842
    %972 = vmatprep.subr.bf16.mxu0 %v847
    %973 = vmatpush1.bf16.msra.mxu0 %v846
    %974 = vmatprep.subr.bf16.mxu0 %v851
    %975 = vmatpush1.bf16.msra.mxu0 %v850
    %976 = vmatprep.subr.bf16.mxu0 %v855
    %977 = vmatpush1.bf16.msra.mxu0 %v854
    %978 = vmatprep.subr.bf16.mxu0 %v859
    %979 = vmatpush1.bf16.msra.mxu0 %v858
    %980 = vmatprep.subr.bf16.mxu0 %v863
    %981 = vmatpush1.bf16.msra.mxu0 %v862
    %982 = vmatprep.subr.bf16.mxu0 %v867
    %983 = vmatpush1.bf16.msra.mxu0 %v866
    %984 = vmatprep.subr.bf16.mxu0 %v871
    %985 = vmatpush1.bf16.msra.mxu0 %v870
    %986 = vmatprep.subr.bf16.mxu0 %v875
    %987 = vmatpush1.bf16.msra.mxu0 %v874
    %988 = vmatprep.subr.bf16.mxu0 %v879
    %989 = vmatpush1.bf16.msra.mxu0 %v878
    %990 = vmatprep.subr.bf16.mxu0 %v883
    %991 = vmatpush1.bf16.msra.mxu0 %v882
    %992 = vmatprep.subr.bf16.mxu0 %v887
    %993 = vmatpush1.bf16.msra.mxu0 %v886
    %994 = vmatprep.subr.bf16.mxu0 %v891
    %995 = vmatpush1.bf16.msra.mxu0 %v890
    %996 = vmatprep.subr.bf16.mxu0 %v895
    %997 = vmatpush1.bf16.msra.mxu0 %v894
    %998 = vmatprep.subr.bf16.mxu0 %v899
    %999 = vmatpush1.bf16.msra.mxu0 %v898
    %1000 = vmatprep.subr.bf16.mxu0 %v903
    %1001 = vmatpush1.bf16.msra.mxu0 %v902
    %1002 = vmatprep.mubr.bf16.mxu0 %v105
    %1003 = vmatmul.mubr.bf16.gmra.mrb[0].mxu0 %v104
    %v1004 = vpop.f32.mrb[0].mxu0
    %v1005 = vadd.f32 %v603, %v1004
    %v1006 = vpop.f32.mrb[0].mxu0
    %v1007 = vadd.f32 %v605, %v1006
    %v1008 = vpop.f32.mrb[0].mxu0
    %v1009 = vpop.f32.mrb[0].mxu0
    %1010 = vdwg.mxu0
    %1011 = vmatprep.subr.bf16.mxu0 %v845
    %1012 = vmatpush1.bf16.msra.mxu0 %v844
    %1013 = vmatprep.subr.bf16.mxu0 %v849
    %1014 = vmatpush1.bf16.msra.mxu0 %v848
    %1015 = vmatprep.subr.bf16.mxu0 %v853
    %1016 = vmatpush1.bf16.msra.mxu0 %v852
    %1017 = vmatprep.subr.bf16.mxu0 %v857
    %1018 = vmatpush1.bf16.msra.mxu0 %v856
    %1019 = vmatprep.subr.bf16.mxu0 %v861
    %1020 = vmatpush1.bf16.msra.mxu0 %v860
    %1021 = vmatprep.subr.bf16.mxu0 %v865
    %1022 = vmatpush1.bf16.msra.mxu0 %v864
    %1023 = vmatprep.subr.bf16.mxu0 %v869
    %1024 = vmatpush1.bf16.msra.mxu0 %v868
    %1025 = vmatprep.subr.bf16.mxu0 %v873
    %1026 = vmatpush1.bf16.msra.mxu0 %v872
    %1027 = vmatprep.subr.bf16.mxu0 %v877
    %1028 = vmatpush1.bf16.msra.mxu0 %v876
    %1029 = vmatprep.subr.bf16.mxu0 %v881
    %1030 = vmatpush1.bf16.msra.mxu0 %v880
    %1031 = vmatprep.subr.bf16.mxu0 %v885
    %1032 = vmatpush1.bf16.msra.mxu0 %v884
    %1033 = vmatprep.subr.bf16.mxu0 %v889
    %1034 = vmatpush1.bf16.msra.mxu0 %v888
    %1035 = vmatprep.subr.bf16.mxu0 %v893
    %1036 = vmatpush1.bf16.msra.mxu0 %v892
    %1037 = vmatprep.subr.bf16.mxu0 %v897
    %1038 = vmatpush1.bf16.msra.mxu0 %v896
    %1039 = vmatprep.subr.bf16.mxu0 %v901
    %1040 = vmatpush1.bf16.msra.mxu0 %v900
    %1041 = vmatprep.subr.bf16.mxu0 %v905
    %1042 = vmatpush1.bf16.msra.mxu0 %v904
    %1043 = vmatprep.mubr.bf16.mxu0 %v105
    %1044 = vmatmul.mubr.bf16.gmra.mrb[0].mxu0 %v104
    %v1045 = vpop.f32.mrb[0].mxu0
    %v1046 = vadd.f32 %v644, %v1045
    %v1047 = vpop.f32.mrb[0].mxu0
    %v1048 = vadd.f32 %v646, %v1047
    %v1049 = vpop.f32.mrb[0].mxu0
    %v1050 = vpop.f32.mrb[0].mxu0
    %1051 = vdwg.mxu0
    %v1052 = vld [vmem:[%s4] sm:$0xf]
    %v1054 = vlaneseq
    %v1055 = vshrl.u32 %v1054, 7
    %v1056 = vsub.s32 0, %v1055
    %v1057 = vrot.slane %v1052, %v1056
    %v1058 = vlaneseq
    %v1059 = vshrl.u32 %v1058, 7
    %v1060 = vsub.s32 1, %v1059
    %v1061 = vrot.slane %v1052, %v1060
    %v1062 = vlaneseq
    %v1063 = vshrl.u32 %v1062, 7
    %v1064 = vsub.s32 2, %v1063
    %v1065 = vrot.slane %v1052, %v1064
    %v1066 = vlaneseq
    %v1067 = vshrl.u32 %v1066, 7
    %v1068 = vsub.s32 3, %v1067
    %v1069 = vrot.slane %v1052, %v1068
    %v1074 = vadd.f32 %v1005, %v1057
    %v1075 = vadd.f32 %v1007, %v1061
    %v1076 = vadd.f32 %v1046, %v1065
    %v1077 = vadd.f32 %v1048, %v1069
    %v1078 = vmax.f32 %v1074, 0.0
    %v1079 = vmax.f32 %v1075, 0.0
    %v1080 = vmax.f32 %v1076, 0.0
    %v1081 = vmax.f32 %v1077, 0.0
    %v1082 = vpack.c.bf16 %v1078, %v1078
    %v1083 = vpack.c.bf16 %v1079, %v1079
    %v1084 = vpack.c.bf16 %v1080, %v1080
    %v1085 = vpack.c.bf16 %v1081, %v1081
    %v1086 = vld [vmem:[#allocation10] sm:$0xf]
    %v1087 = vld [vmem:[#allocation10 + $0x4] sm:$0xf]
    %v1088 = vld [vmem:[#allocation10 + $0x8] sm:$0xf]
    %v1089 = vld [vmem:[#allocation10 + $0xc] sm:$0xf]
    %v1090 = vld [vmem:[#allocation10 + $0x10] sm:$0xf]
    %v1091 = vld [vmem:[#allocation10 + $0x14] sm:$0xf]
    %v1092 = vld [vmem:[#allocation10 + $0x18] sm:$0xf]
    %v1093 = vld [vmem:[#allocation10 + $0x1c] sm:$0xf]
    %v1094 = vld [vmem:[#allocation10 + $0x20] sm:$0xf]
    %v1095 = vld [vmem:[#allocation10 + $0x24] sm:$0xf]
    %v1096 = vld [vmem:[#allocation10 + $0x28] sm:$0xf]
    %v1097 = vld [vmem:[#allocation10 + $0x2c] sm:$0xf]
    %v1098 = vld [vmem:[#allocation10 + $0x30] sm:$0xf]
    %v1099 = vld [vmem:[#allocation10 + $0x34] sm:$0xf]
    %v1100 = vld [vmem:[#allocation10 + $0x38] sm:$0xf]
    %v1101 = vld [vmem:[#allocation10 + $0x3c] sm:$0xf]
    %v1102 = vld [vmem:[#allocation10 + $0x40] sm:$0xf]
    %v1103 = vld [vmem:[#allocation10 + $0x44] sm:$0xf]
    %v1104 = vld [vmem:[#allocation10 + $0x48] sm:$0xf]
    %v1105 = vld [vmem:[#allocation10 + $0x4c] sm:$0xf]
    %v1106 = vld [vmem:[#allocation10 + $0x50] sm:$0xf]
    %v1107 = vld [vmem:[#allocation10 + $0x54] sm:$0xf]
    %v1108 = vld [vmem:[#allocation10 + $0x58] sm:$0xf]
    %v1109 = vld [vmem:[#allocation10 + $0x5c] sm:$0xf]
    %v1110 = vld [vmem:[#allocation10 + $0x60] sm:$0xf]
    %v1111 = vld [vmem:[#allocation10 + $0x64] sm:$0xf]
    %v1112 = vld [vmem:[#allocation10 + $0x68] sm:$0xf]
    %v1113 = vld [vmem:[#allocation10 + $0x6c] sm:$0xf]
    %v1114 = vld [vmem:[#allocation10 + $0x70] sm:$0xf]
    %v1115 = vld [vmem:[#allocation10 + $0x74] sm:$0xf]
    %v1116 = vld [vmem:[#allocation10 + $0x78] sm:$0xf]
    %v1117 = vld [vmem:[#allocation10 + $0x7c] sm:$0xf]
    %v1118 = vld [vmem:[#allocation10 + $0x80] sm:$0xf]
    %v1119 = vld [vmem:[#allocation10 + $0x84] sm:$0xf]
    %v1120 = vld [vmem:[#allocation10 + $0x88] sm:$0xf]
    %v1121 = vld [vmem:[#allocation10 + $0x8c] sm:$0xf]
    %v1122 = vld [vmem:[#allocation10 + $0x90] sm:$0xf]
    %v1123 = vld [vmem:[#allocation10 + $0x94] sm:$0xf]
    %v1124 = vld [vmem:[#allocation10 + $0x98] sm:$0xf]
    %v1125 = vld [vmem:[#allocation10 + $0x9c] sm:$0xf]
    %v1126 = vld [vmem:[#allocation10 + $0xa0] sm:$0xf]
    %v1127 = vld [vmem:[#allocation10 + $0xa4] sm:$0xf]
    %v1128 = vld [vmem:[#allocation10 + $0xa8] sm:$0xf]
    %v1129 = vld [vmem:[#allocation10 + $0xac] sm:$0xf]
    %v1130 = vld [vmem:[#allocation10 + $0xb0] sm:$0xf]
    %v1131 = vld [vmem:[#allocation10 + $0xb4] sm:$0xf]
    %v1132 = vld [vmem:[#allocation10 + $0xb8] sm:$0xf]
    %v1133 = vld [vmem:[#allocation10 + $0xbc] sm:$0xf]
    %v1134 = vld [vmem:[#allocation10 + $0xc0] sm:$0xf]
    %v1135 = vld [vmem:[#allocation10 + $0xc4] sm:$0xf]
    %v1136 = vld [vmem:[#allocation10 + $0xc8] sm:$0xf]
    %v1137 = vld [vmem:[#allocation10 + $0xcc] sm:$0xf]
    %v1138 = vld [vmem:[#allocation10 + $0xd0] sm:$0xf]
    %v1139 = vld [vmem:[#allocation10 + $0xd4] sm:$0xf]
    %v1140 = vld [vmem:[#allocation10 + $0xd8] sm:$0xf]
    %v1141 = vld [vmem:[#allocation10 + $0xdc] sm:$0xf]
    %v1142 = vld [vmem:[#allocation10 + $0xe0] sm:$0xf]
    %v1143 = vld [vmem:[#allocation10 + $0xe4] sm:$0xf]
    %v1144 = vld [vmem:[#allocation10 + $0xe8] sm:$0xf]
    %v1145 = vld [vmem:[#allocation10 + $0xec] sm:$0xf]
    %v1146 = vld [vmem:[#allocation10 + $0xf0] sm:$0xf]
    %v1147 = vld [vmem:[#allocation10 + $0xf4] sm:$0xf]
    %v1148 = vld [vmem:[#allocation10 + $0xf8] sm:$0xf]
    %v1149 = vld [vmem:[#allocation10 + $0xfc] sm:$0xf]
    %v1150 = vld [vmem:[%s6] sm:$0x1]
    %v1152 = vlaneseq
    %v1153 = vshrl.u32 %v1152, 7
    %v1154 = vsub.s32 0, %v1153
    %v1155 = vrot.slane %v1150, %v1154
    %v1221 = vunpack.c.l.b16 %v1086
    %v1222 = vunpack.c.l.b16 %v1087
    %v1223 = vunpack.c.l.b16 %v1088
    %v1224 = vunpack.c.l.b16 %v1089
    %v1225 = vunpack.c.l.b16 %v1090
    %v1226 = vunpack.c.l.b16 %v1091
    %v1227 = vunpack.c.l.b16 %v1092
    %v1228 = vunpack.c.l.b16 %v1093
    %v1229 = vunpack.c.l.b16 %v1094
    %v1230 = vunpack.c.l.b16 %v1095
    %v1231 = vunpack.c.l.b16 %v1096
    %v1232 = vunpack.c.l.b16 %v1097
    %v1233 = vunpack.c.l.b16 %v1098
    %v1234 = vunpack.c.l.b16 %v1099
    %v1235 = vunpack.c.l.b16 %v1100
    %v1236 = vunpack.c.l.b16 %v1101
    %v1237 = vunpack.c.l.b16 %v1102
    %v1238 = vunpack.c.l.b16 %v1103
    %v1239 = vunpack.c.l.b16 %v1104
    %v1240 = vunpack.c.l.b16 %v1105
    %v1241 = vunpack.c.l.b16 %v1106
    %v1242 = vunpack.c.l.b16 %v1107
    %v1243 = vunpack.c.l.b16 %v1108
    %v1244 = vunpack.c.l.b16 %v1109
    %v1245 = vunpack.c.l.b16 %v1110
    %v1246 = vunpack.c.l.b16 %v1111
    %v1247 = vunpack.c.l.b16 %v1112
    %v1248 = vunpack.c.l.b16 %v1113
    %v1249 = vunpack.c.l.b16 %v1114
    %v1250 = vunpack.c.l.b16 %v1115
    %v1251 = vunpack.c.l.b16 %v1116
    %v1252 = vunpack.c.l.b16 %v1117
    %v1253 = vunpack.c.l.b16 %v1118
    %v1254 = vunpack.c.l.b16 %v1119
    %v1255 = vunpack.c.l.b16 %v1120
    %v1256 = vunpack.c.l.b16 %v1121
    %v1257 = vunpack.c.l.b16 %v1122
    %v1258 = vunpack.c.l.b16 %v1123
    %v1259 = vunpack.c.l.b16 %v1124
    %v1260 = vunpack.c.l.b16 %v1125
    %v1261 = vunpack.c.l.b16 %v1126
    %v1262 = vunpack.c.l.b16 %v1127
    %v1263 = vunpack.c.l.b16 %v1128
    %v1264 = vunpack.c.l.b16 %v1129
    %v1265 = vunpack.c.l.b16 %v1130
    %v1266 = vunpack.c.l.b16 %v1131
    %v1267 = vunpack.c.l.b16 %v1132
    %v1268 = vunpack.c.l.b16 %v1133
    %v1269 = vunpack.c.l.b16 %v1134
    %v1270 = vunpack.c.l.b16 %v1135
    %v1271 = vunpack.c.l.b16 %v1136
    %v1272 = vunpack.c.l.b16 %v1137
    %v1273 = vunpack.c.l.b16 %v1138
    %v1274 = vunpack.c.l.b16 %v1139
    %v1275 = vunpack.c.l.b16 %v1140
    %v1276 = vunpack.c.l.b16 %v1141
    %v1277 = vunpack.c.l.b16 %v1142
    %v1278 = vunpack.c.l.b16 %v1143
    %v1279 = vunpack.c.l.b16 %v1144
    %v1280 = vunpack.c.l.b16 %v1145
    %v1281 = vunpack.c.l.b16 %v1146
    %v1282 = vunpack.c.l.b16 %v1147
    %v1283 = vunpack.c.l.b16 %v1148
    %v1284 = vunpack.c.l.b16 %v1149
    %v1285 = vpack.c.b16 %v1222, %v1221
    %v1286 = vpack.c.b16 %v1224, %v1223
    %v1287 = vpack.c.b16 %v1226, %v1225
    %v1288 = vpack.c.b16 %v1228, %v1227
    %v1289 = vpack.c.b16 %v1230, %v1229
    %v1290 = vpack.c.b16 %v1232, %v1231
    %v1291 = vpack.c.b16 %v1234, %v1233
    %v1292 = vpack.c.b16 %v1236, %v1235
    %v1293 = vpack.c.b16 %v1238, %v1237
    %v1294 = vpack.c.b16 %v1240, %v1239
    %v1295 = vpack.c.b16 %v1242, %v1241
    %v1296 = vpack.c.b16 %v1244, %v1243
    %v1297 = vpack.c.b16 %v1246, %v1245
    %v1298 = vpack.c.b16 %v1248, %v1247
    %v1299 = vpack.c.b16 %v1250, %v1249
    %v1300 = vpack.c.b16 %v1252, %v1251
    %v1301 = vpack.c.b16 %v1254, %v1253
    %v1302 = vpack.c.b16 %v1256, %v1255
    %v1303 = vpack.c.b16 %v1258, %v1257
    %v1304 = vpack.c.b16 %v1260, %v1259
    %v1305 = vpack.c.b16 %v1262, %v1261
    %v1306 = vpack.c.b16 %v1264, %v1263
    %v1307 = vpack.c.b16 %v1266, %v1265
    %v1308 = vpack.c.b16 %v1268, %v1267
    %v1309 = vpack.c.b16 %v1270, %v1269
    %v1310 = vpack.c.b16 %v1272, %v1271
    %v1311 = vpack.c.b16 %v1274, %v1273
    %v1312 = vpack.c.b16 %v1276, %v1275
    %v1313 = vpack.c.b16 %v1278, %v1277
    %v1314 = vpack.c.b16 %v1280, %v1279
    %v1315 = vpack.c.b16 %v1282, %v1281
    %v1316 = vpack.c.b16 %v1284, %v1283
    %1349 = vmatprep.subr.bf16.mxu0 0
    %1350 = vmatpush1.bf16.msra.mxu0 %v1285
    %1351 = vmatprep.subr.bf16.mxu0 0
    %1352 = vmatpush1.bf16.msra.mxu0 %v1286
    %1353 = vmatprep.subr.bf16.mxu0 0
    %1354 = vmatpush1.bf16.msra.mxu0 %v1287
    %1355 = vmatprep.subr.bf16.mxu0 0
    %1356 = vmatpush1.bf16.msra.mxu0 %v1288
    %1357 = vmatprep.subr.bf16.mxu0 0
    %1358 = vmatpush1.bf16.msra.mxu0 %v1289
    %1359 = vmatprep.subr.bf16.mxu0 0
    %1360 = vmatpush1.bf16.msra.mxu0 %v1290
    %1361 = vmatprep.subr.bf16.mxu0 0
    %1362 = vmatpush1.bf16.msra.mxu0 %v1291
    %1363 = vmatprep.subr.bf16.mxu0 0
    %1364 = vmatpush1.bf16.msra.mxu0 %v1292
    %1365 = vmatprep.subr.bf16.mxu0 0
    %1366 = vmatpush1.bf16.msra.mxu0 %v1293
    %1367 = vmatprep.subr.bf16.mxu0 0
    %1368 = vmatpush1.bf16.msra.mxu0 %v1294
    %1369 = vmatprep.subr.bf16.mxu0 0
    %1370 = vmatpush1.bf16.msra.mxu0 %v1295
    %1371 = vmatprep.subr.bf16.mxu0 0
    %1372 = vmatpush1.bf16.msra.mxu0 %v1296
    %1373 = vmatprep.subr.bf16.mxu0 0
    %1374 = vmatpush1.bf16.msra.mxu0 %v1297
    %1375 = vmatprep.subr.bf16.mxu0 0
    %1376 = vmatpush1.bf16.msra.mxu0 %v1298
    %1377 = vmatprep.subr.bf16.mxu0 0
    %1378 = vmatpush1.bf16.msra.mxu0 %v1299
    %1379 = vmatprep.subr.bf16.mxu0 0
    %1380 = vmatpush1.bf16.msra.mxu0 %v1300
    %1381 = vmatprep.mubr.bf16.mxu0 %v1083
    %1382 = vmatmul.mubr.bf16.gmra.mrb[0].mxu0 %v1082
    %v1383 = vpop.f32.mrb[0].mxu0
    %v1384 = vadd.f32 %v1155, %v1383
    %v1385 = vpop.f32.mrb[0].mxu0
    %v1386 = vpop.f32.mrb[0].mxu0
    %v1387 = vpop.f32.mrb[0].mxu0
    %1388 = vdwg.mxu0
    %1389 = vmatprep.subr.bf16.mxu0 0
    %1390 = vmatpush1.bf16.msra.mxu0 %v1301
    %1391 = vmatprep.subr.bf16.mxu0 0
    %1392 = vmatpush1.bf16.msra.mxu0 %v1302
    %1393 = vmatprep.subr.bf16.mxu0 0
    %1394 = vmatpush1.bf16.msra.mxu0 %v1303
    %1395 = vmatprep.subr.bf16.mxu0 0
    %1396 = vmatpush1.bf16.msra.mxu0 %v1304
    %1397 = vmatprep.subr.bf16.mxu0 0
    %1398 = vmatpush1.bf16.msra.mxu0 %v1305
    %1399 = vmatprep.subr.bf16.mxu0 0
    %1400 = vmatpush1.bf16.msra.mxu0 %v1306
    %1401 = vmatprep.subr.bf16.mxu0 0
    %1402 = vmatpush1.bf16.msra.mxu0 %v1307
    %1403 = vmatprep.subr.bf16.mxu0 0
    %1404 = vmatpush1.bf16.msra.mxu0 %v1308
    %1405 = vmatprep.subr.bf16.mxu0 0
    %1406 = vmatpush1.bf16.msra.mxu0 %v1309
    %1407 = vmatprep.subr.bf16.mxu0 0
    %1408 = vmatpush1.bf16.msra.mxu0 %v1310
    %1409 = vmatprep.subr.bf16.mxu0 0
    %1410 = vmatpush1.bf16.msra.mxu0 %v1311
    %1411 = vmatprep.subr.bf16.mxu0 0
    %1412 = vmatpush1.bf16.msra.mxu0 %v1312
    %1413 = vmatprep.subr.bf16.mxu0 0
    %1414 = vmatpush1.bf16.msra.mxu0 %v1313
    %1415 = vmatprep.subr.bf16.mxu0 0
    %1416 = vmatpush1.bf16.msra.mxu0 %v1314
    %1417 = vmatprep.subr.bf16.mxu0 0
    %1418 = vmatpush1.bf16.msra.mxu0 %v1315
    %1419 = vmatprep.subr.bf16.mxu0 0
    %1420 = vmatpush1.bf16.msra.mxu0 %v1316
    %1421 = vmatprep.mubr.bf16.mxu0 %v1085
    %1422 = vmatmul.mubr.bf16.gmra.mrb[0].mxu0 %v1084
    %v1423 = vpop.f32.mrb[0].mxu0
    %v1424 = vadd.f32 %v1384, %v1423
    %v1425 = vpop.f32.mrb[0].mxu0
    %v1426 = vpop.f32.mrb[0].mxu0
    %v1427 = vpop.f32.mrb[0].mxu0
    %1428 = vdwg.mxu0
    %v1429 = vpack.c.bf16 %v1424, %v1424
    %1430 = vst [vmem:[#allocation11] sm:$0x1] %v1429
    // Predicated region
    $region50: #{tpu_custom_call.1} parent=1 // pred_check
      _
    $region51: #{tpu_custom_call.1} parent=1 // pred_check_branch
      %1432 = sbr.rel (0) target = $region53
    $region52: #{tpu_custom_call.1} parent=1 // pred_region
      %s1434 = ssub.s32 16, 16
      %1435 = vsyncadd [#allocation4], %s1434
      %s1437 = sshll.u32 [#allocation11], 4
      %s1438 = int_to_ptr.vmem [resolvable:$true] %s1437
      %1440 = dma.vmem_to_hbm [thread:$0]  %s1438, 16, %s7, [#allocation4]
    $region53: #{tpu_custom_call.1} parent=1 // pred_fallthru
      _
    // Predicated region
    $region54: #{tpu_custom_call.1} parent=1 // pred_check
      _
    $region55: #{tpu_custom_call.1} parent=1 // pred_check_branch
      %1442 = sbr.rel (0) target = $region57
    $region56: #{tpu_custom_call.1} parent=1 // pred_region
      %1443 = dma.done [#allocation4], 16
    $region57: #{tpu_custom_call.1} parent=1 // pred_fallthru
      _
    %1444 = vsyncpa [#allocation3], 1
    %1445 = vsyncpa [#allocation6], 1
    %1446 = vsyncpa [#allocation9], 1
    %1447 = vsyncpa [#allocation4], 1

</llo_original>
